<compile_context>
chip_gen: v7x
topology: tpu7x:2x2x1
jax: 0.10.0
libtpu: 0.0.40
codegen_flags: <defaults>
</compile_context>

<pallas_src>
import math

import jax
import jax.numpy as jnp
from jax.experimental import pallas as pl
from jax.experimental.pallas import tpu as pltpu

_LANES = 128          # lane-dense last dim -> unmasked vector stores
_ROW_TILE_MAX = 1024  # 1024 x 128 x 4B = 512 KiB per f32 tile (2 MiB double-buffered in+out)


def _copy_kernel(src_ref, dst_ref):
    # Identity pass-through of the current lane-dense tile.
    dst_ref[...] = src_ref[...]


def _round_up(x: int, m: int) -> int:
    return ((x + m - 1) // m) * m


def _fused_passthrough(flat: jax.Array) -> jax.Array:
    """Run a flat 1-D array through a single lane-dense tiled Pallas copy."""
    total = flat.shape[0]
    rows = pl.cdiv(total, _LANES)
    # Large, sublane-aligned row tile; pad row count to a multiple of the tile
    # so every grid step is a full, unmasked (row_tile, 128) block.
    row_tile = min(_ROW_TILE_MAX, _round_up(rows, 8))
    rows_padded = _round_up(rows, row_tile)
    padded_total = rows_padded * _LANES

    flat_padded = jnp.pad(flat, (0, padded_total - total))
    slab = flat_padded.reshape(rows_padded, _LANES)

    out_slab = pl.pallas_call(
        _copy_kernel,
        out_shape=jax.ShapeDtypeStruct((rows_padded, _LANES), slab.dtype),
        grid_spec=pltpu.PrefetchScalarGridSpec(
            num_scalar_prefetch=0,
            grid=(rows_padded // row_tile,),
            in_specs=[pl.BlockSpec((row_tile, _LANES), lambda i: (i, 0))],
            out_specs=pl.BlockSpec((row_tile, _LANES), lambda i: (i, 0)),
        ),
        # The input slab is a fresh temporary; alias it to the output so the
        # identity copy does not allocate / round-trip a second HBM buffer.
        input_output_aliases={0: 0},
        compiler_params=pltpu.CompilerParams(
            dimension_semantics=("parallel",),  # v7x: shards grid over 2 TCs
        ),
    )(slab)

    return out_slab.reshape(-1)[:total]


def matrix_factorization_forward(user_emb: jax.Array, item_emb: jax.Array):
    """Equivalent of Matrix_Factorization.forward(): returns (user_emb, item_emb).

    Both tables are processed in a single fused Pallas launch.
    """
    user_num, emb_size = user_emb.shape
    item_num, _ = item_emb.shape

    flat = jnp.concatenate([user_emb.reshape(-1), item_emb.reshape(-1)])
    out_flat = _fused_passthrough(flat)

    n_user = user_num * emb_size
    out_user = out_flat[:n_user].reshape(user_num, emb_size)
    out_item = out_flat[n_user:].reshape(item_num, emb_size)
    return out_user, out_item


def _xavier_uniform(key, shape, dtype=jnp.float32):
    # nn.init.xavier_uniform_ for a 2-D tensor [fan_out, fan_in].
    fan_out, fan_in = shape
    bound = math.sqrt(6.0 / (fan_in + fan_out))
    return jax.random.uniform(key, shape, dtype=dtype, minval=-bound, maxval=bound)


if __name__ == "__main__":
    # Small synthetic config: user_num=16, item_num=24, emb_size=32.
    user_num, item_num, emb_size = 16, 24, 32

    key = jax.random.PRNGKey(0)
    k_user, k_item = jax.random.split(key)
    user_emb = _xavier_uniform(k_user, (user_num, emb_size))
    item_emb = _xavier_uniform(k_item, (item_num, emb_size))

    fwd = jax.jit(matrix_factorization_forward)
    out_user, out_item = fwd(user_emb, item_emb)
    jax.block_until_ready((out_user, out_item))

    # Verify forward() semantics: outputs are exactly the embedding tables.
    assert out_user.shape == (user_num, emb_size) and out_user.dtype == user_emb.dtype
    assert out_item.shape == (item_num, emb_size) and out_item.dtype == item_emb.dtype
    assert bool(jnp.all(out_user == user_emb))
    assert bool(jnp.all(out_item == item_emb))

    print("KERNEL_OK")
</pallas_src>

<mosaic_0001>
module attributes {stable_mosaic.version = 11 : i64} {
  func.func @_copy_kernel(%arg0: i32, %arg1: memref<16x128xf32, #tpu.memory_space<vmem>>, %arg2: memref<16x128xf32, #tpu.memory_space<vmem>>) attributes {dimension_semantics = [#tpu.dimension_semantics<parallel>], iteration_bounds = array<i64: 1>, scalar_prefetch = 0 : i64, scratch_operands = 0 : i64, tpu.core_type = #tpu.core_type<tc>, window_params = [{transform_indices = @transform_0, window_bounds = array<i64: 16, 128>}, {transform_indices = @transform_1, window_bounds = array<i64: 16, 128>}]} {
    %c0 = arith.constant 0 : index
    %c0_0 = arith.constant 0 : index
    %0 = vector.load %arg1[%c0, %c0_0] : memref<16x128xf32, #tpu.memory_space<vmem>>, vector<16x128xf32>
    %c0_1 = arith.constant 0 : index
    %c0_2 = arith.constant 0 : index
    %1 = vector.load %arg2[%c0_1, %c0_2] : memref<16x128xf32, #tpu.memory_space<vmem>>, vector<16x128xf32>
    tpu.vector_store %arg2[%c0_1, %c0_2], %0 {strides = array<i32>} : memref<16x128xf32, #tpu.memory_space<vmem>>, vector<16x128xf32>,
    return
  }
  func.func @transform_0(%arg0: i32) -> (i32, i32) {
    %c0_i32 = arith.constant 0 : i32
    %c0_i32_0 = arith.constant 0 : i32
    return %arg0, %c0_i32 : i32, i32
  }
  func.func @transform_1(%arg0: i32) -> (i32, i32) {
    %c0_i32 = arith.constant 0 : i32
    %c0_i32_0 = arith.constant 0 : i32
    return %arg0, %c0_i32 : i32, i32
  }
}

</mosaic_0001>

<llo_original>
// kernel: matrix_factorization_forward.1
$region0: #{matrix_factorization_forward.1}
  #allocation0 [shape = 'u32[]', space=smem, size = 0x4, offset = 0x4, fixed_abs, tag = 'smem constant byte address 0x4 - core index']
  #allocation1 [shape = 'u32[144,128]{1,0:T(1,128)}', space=vmem, size = 0x12000, scoped, tag = 'internal scratch']
  %s0 = inlined_call_operand.vmem [shape: f32[16,128], index: 0, kind: input, shape index: {}, may-alias: {0,1}]
  %s1 = inlined_call_operand.vmem [shape: f32[16,128], index: 1, kind: output, shape index: {}, may-alias: {0,1}]
  %s2 = sld [smem:[#allocation0]]
  $region14: #{matrix_factorization_forward.1} parent=0
    _
  %s4 = ssub.s32 1, %s2
  %s5 = scalar_select 0, %s4, %s2
  // Predicated region
  $region2: #{matrix_factorization_forward.1} parent=0 // pred_check
    _
  $region3: #{matrix_factorization_forward.1} parent=0 // pred_check_branch
    %7 = sbr.rel (0) target = $region5
  $region4: #{matrix_factorization_forward.1} parent=0 // pred_region
    _
  $region5: #{matrix_factorization_forward.1} parent=0 // pred_fallthru
    _
  %v8 = vld [vmem:[%s0] sm:$0xff]
  %v9 = vld [vmem:[%s0 + $0x8] sm:$0xff]
  %10 = vst [vmem:[%s1] sm:$0xff] %v8
  %11 = vst [vmem:[%s1 + $0x8] sm:$0xff] %v9
  // Predicated region
  $region6: #{matrix_factorization_forward.1} parent=0 // pred_check
    _
  $region7: #{matrix_factorization_forward.1} parent=0 // pred_check_branch
    %13 = sbr.rel (0) target = $region9
  $region8: #{matrix_factorization_forward.1} parent=0 // pred_region
    _
  $region9: #{matrix_factorization_forward.1} parent=0 // pred_fallthru
    _
  // Predicated region
  $region10: #{matrix_factorization_forward.1} parent=0 // pred_check
    _
  $region11: #{matrix_factorization_forward.1} parent=0 // pred_check_branch
    %15 = sbr.rel (0) target = $region13
  $region12: #{matrix_factorization_forward.1} parent=0 // pred_region
    _
  $region13: #{matrix_factorization_forward.1} parent=0 // pred_fallthru
    _

</llo_original>
